<compile_context>
chip_gen: v6e
topology: v6e:2x2x1
jax: 0.10.0
libtpu: 0.0.40
codegen_flags: <defaults>
</compile_context>

<pallas_src>
import functools
import math

import jax
import jax.numpy as jnp
from jax.experimental import pallas as pl
from jax.experimental.pallas import tpu as pltpu


def _round_up(x, m):
    return ((x + m - 1) // m) * m


def _sublane_min(dtype):
    itemsize = jnp.dtype(dtype).itemsize
    return {4: 8, 2: 16, 1: 32}.get(itemsize, 8)


def _divisor_tile(pref, dim, granule):
    """Largest multiple of `granule` that is <= pref and divides `dim`.

    `dim` is already a multiple of `granule`, so this terminates at `granule`.
    """
    t = min(pref, dim)
    t -= t % granule
    t = max(t, granule)
    while dim % t:
        t -= granule
    return t


def _linear_kernel(x_ref, w_ref, b_ref, o_ref, acc_ref):
    # x_ref: (tm, tk), w_ref: (tk, tn), b_ref: (1, tn),
    # o_ref: (tm, tn), acc_ref: (tm, tn) f32 scratch.
    k = pl.program_id(2)

    @pl.when(k == 0)
    def _init():
        # Fold the bias into the accumulator init (broadcast over rows).
        acc_ref[...] = jnp.broadcast_to(
            b_ref[...].astype(jnp.float32), acc_ref.shape)

    acc_ref[...] += jnp.dot(x_ref[...], w_ref[...],
                            preferred_element_type=jnp.float32)

    @pl.when(k == pl.num_programs(2) - 1)
    def _finalize():
        o_ref[...] = acc_ref[...].astype(o_ref.dtype)


@functools.partial(jax.jit, static_argnames=("tm", "tn", "tk"))
def _lazy_linear_2d(x, weight_kn, bias, *, tm, tn, tk):
    """x: (M, K); weight_kn: (K, N) [pre-transposed]; bias: (N,) -> (M, N)."""
    M, K = x.shape
    Kw, N = weight_kn.shape
    assert K == Kw, "in_features mismatch between x and weight"

    # ---- tile selection (dtype-aware, 128-lane aligned) -----------------
    sub_m = _sublane_min(x.dtype)
    tm_eff = min(tm, _round_up(M, sub_m))
    m_pad = _round_up(M, tm_eff)

    n128 = _round_up(N, 128)
    tn_eff = _divisor_tile(tn, n128, 128)

    k128 = _round_up(K, 128)
    tk_eff = _divisor_tile(tk, k128, 128)

    # ---- zero padding ----------------------------------------------------
    # Zeros along K contribute nothing to the dot product; padded M rows and
    # N columns are sliced away after the call.
    if (m_pad, k128) != (M, K):
        x = jnp.pad(x, ((0, m_pad - M), (0, k128 - K)))
    if (k128, n128) != (K, N):
        weight_kn = jnp.pad(weight_kn, ((0, k128 - K), (0, n128 - N)))
    b2 = bias.reshape(1, N)
    if n128 != N:
        b2 = jnp.pad(b2, ((0, 0), (0, n128 - N)))

    grid = (m_pad // tm_eff, n128 // tn_eff, k128 // tk_eff)

    out = pl.pallas_call(
        _linear_kernel,
        out_shape=jax.ShapeDtypeStruct((m_pad, n128), x.dtype),
        grid_spec=pltpu.PrefetchScalarGridSpec(
            num_scalar_prefetch=0,
            grid=grid,
            in_specs=[
                pl.BlockSpec((tm_eff, tk_eff), lambda i, j, k: (i, k)),
                pl.BlockSpec((tk_eff, tn_eff), lambda i, j, k: (k, j)),
                pl.BlockSpec((1, tn_eff), lambda i, j, k: (0, j)),
            ],
            out_specs=pl.BlockSpec((tm_eff, tn_eff), lambda i, j, k: (i, j)),
            scratch_shapes=[pltpu.VMEM((tm_eff, tn_eff), jnp.float32)],
        ),
        compiler_params=pltpu.CompilerParams(
            dimension_semantics=("parallel", "parallel", "arbitrary"),
            vmem_limit_bytes=32 * 1024 * 1024,
        ),
    )(x, weight_kn, b2)

    if (m_pad, n128) != (M, N):
        out = out[:M, :N]
    return out


def lazy_linear_forward(x, weight_kn, bias, *, tm=256, tn=512, tk=1024):
    """LazyLinear forward. x: (..., in_features); weight_kn: (in, out); bias: (out,)."""
    lead = x.shape[:-1]
    in_features = x.shape[-1]
    out_features = weight_kn.shape[1]
    x2 = x.reshape(-1, in_features)
    y2 = _lazy_linear_2d(x2, weight_kn, bias, tm=tm, tn=tn, tk=tk)
    return {"x": y2.reshape(*lead, out_features)}


def init_lazy_linear_params(key, in_features, out_features, dtype=jnp.float32):
    """nn.Linear-style init; weight is returned PRE-TRANSPOSED as (K, N).

    The one-time transpose-at-init replaces a full per-call HBM read+write
    of the weight (the `weight.T` the old wrapper paid every forward).
    """
    kw, kb = jax.random.split(key)
    bound = 1.0 / math.sqrt(in_features)
    weight_torch = jax.random.uniform(
        kw, (out_features, in_features), dtype, minval=-bound, maxval=bound)
    bias = jax.random.uniform(
        kb, (out_features,), dtype, minval=-bound, maxval=bound)
    weight_kn = jnp.asarray(weight_torch.T)  # (in_features, out_features)
    return weight_kn, bias, weight_torch


if __name__ == "__main__":
    key = jax.random.PRNGKey(0)
    kx, kp, kx2, kp2 = jax.random.split(key, 4)

    # --- small demo matching the module's forward (x: (batch, in_features)) ---
    batch, in_features, out_features = 8, 32, 64
    x = jax.random.normal(kx, (batch, in_features), jnp.float32)
    weight_kn, bias, weight_torch = init_lazy_linear_params(
        kp, in_features, out_features)

    out = lazy_linear_forward(x, weight_kn, bias)
    y = jax.block_until_ready(out["x"])

    y_ref = x @ weight_torch.T + bias          # PyTorch semantics reference
    assert y.shape == (batch, out_features)
    assert jnp.allclose(y, y_ref, atol=1e-3, rtol=1e-3)

    # --- second check: odd shapes + small tiles to exercise M/N/K tiling,
    #     zero-padding and the K-accumulation path (grid = (3, 3, 2)) ---------
    M2, K2, N2 = 48, 200, 300
    x2 = jax.random.normal(kx2, (M2, K2), jnp.float32)
    w2_kn, b2, w2_torch = init_lazy_linear_params(kp2, K2, N2)
    out2 = lazy_linear_forward(x2, w2_kn, b2, tm=16, tn=128, tk=128)
    y2 = jax.block_until_ready(out2["x"])
    y2_ref = x2 @ w2_torch.T + b2
    assert y2.shape == (M2, N2)
    assert jnp.allclose(y2, y2_ref, atol=1e-3, rtol=1e-3)

    print("KERNEL_OK")
</pallas_src>

<mosaic_0001>
module attributes {stable_mosaic.version = 11 : i64} {
  func.func @_linear_kernel(%arg0: i32, %arg1: i32, %arg2: i32, %arg3: memref<8x128xf32, #tpu.memory_space<vmem>>, %arg4: memref<128x128xf32, #tpu.memory_space<vmem>>, %arg5: memref<1x128xf32, #tpu.memory_space<vmem>>, %arg6: memref<8x128xf32, #tpu.memory_space<vmem>>, %arg7: memref<8x128xf32, #tpu.memory_space<vmem>>) attributes {dimension_semantics = [#tpu.dimension_semantics<parallel>, #tpu.dimension_semantics<parallel>, #tpu.dimension_semantics<arbitrary>], iteration_bounds = array<i64: 1, 1, 1>, scalar_prefetch = 0 : i64, scratch_operands = 1 : i64, tpu.core_type = #tpu.core_type<tc>, window_params = [{transform_indices = @transform_0, window_bounds = array<i64: 8, 128>}, {transform_indices = @transform_1, window_bounds = array<i64: 128, 128>}, {transform_indices = @transform_2, window_bounds = array<i64: 1, 128>}, {transform_indices = @transform_3, window_bounds = array<i64: 8, 128>}]} {
    %c0_i32 = arith.constant 0 : i32
    %0 = arith.cmpi eq, %arg2, %c0_i32 : i32
    %1 = arith.extui %0 : i1 to i32
    %c0_i32_0 = arith.constant 0 : i32
    %2 = arith.cmpi ne, %1, %c0_i32_0 : i32
    scf.if %2 {
      %c0_10 = arith.constant 0 : index
      %c0_11 = arith.constant 0 : index
      %12 = vector.load %arg5[%c0_10, %c0_11] : memref<1x128xf32, #tpu.memory_space<vmem>>, vector<1x128xf32>
      %13 = vector.shape_cast %12 : vector<1x128xf32> to vector<1x128xf32>
      %14 = vector.broadcast %13 : vector<1x128xf32> to vector<8x128xf32>
      %c0_12 = arith.constant 0 : index
      %c0_13 = arith.constant 0 : index
      %15 = vector.load %arg7[%c0_12, %c0_13] : memref<8x128xf32, #tpu.memory_space<vmem>>, vector<8x128xf32>
      tpu.vector_store %arg7[%c0_12, %c0_13], %14 {strides = array<i32>} : memref<8x128xf32, #tpu.memory_space<vmem>>, vector<8x128xf32>,
    } else {
    }
    %c0 = arith.constant 0 : index
    %c0_1 = arith.constant 0 : index
    %3 = vector.load %arg7[%c0, %c0_1] : memref<8x128xf32, #tpu.memory_space<vmem>>, vector<8x128xf32>
    %c0_2 = arith.constant 0 : index
    %c0_3 = arith.constant 0 : index
    %4 = vector.load %arg3[%c0_2, %c0_3] : memref<8x128xf32, #tpu.memory_space<vmem>>, vector<8x128xf32>
    %c0_4 = arith.constant 0 : index
    %c0_5 = arith.constant 0 : index
    %5 = vector.load %arg4[%c0_4, %c0_5] : memref<128x128xf32, #tpu.memory_space<vmem>>, vector<128x128xf32>
    %cst = arith.constant dense<0.000000e+00> : vector<8x128xf32>
    %6 = tpu.matmul %4, %5, %cst {dimension_numbers = #tpu.dot_dimension_numbers<[1], [0], [0], [1], [0, 0, 1, 1], [], []>} : vector<8x128xf32>, vector<128x128xf32>, vector<8x128xf32> -> vector<8x128xf32>
    %7 = arith.addf %3, %6 : vector<8x128xf32>
    %c0_6 = arith.constant 0 : index
    %c0_7 = arith.constant 0 : index
    %8 = vector.load %arg7[%c0_6, %c0_7] : memref<8x128xf32, #tpu.memory_space<vmem>>, vector<8x128xf32>
    tpu.vector_store %arg7[%c0_6, %c0_7], %7 {strides = array<i32>} : memref<8x128xf32, #tpu.memory_space<vmem>>, vector<8x128xf32>,
    %c0_i32_8 = arith.constant 0 : i32
    %9 = arith.cmpi eq, %arg2, %c0_i32_8 : i32
    %10 = arith.extui %9 : i1 to i32
    %c0_i32_9 = arith.constant 0 : i32
    %11 = arith.cmpi ne, %10, %c0_i32_9 : i32
    scf.if %11 {
      %c0_10 = arith.constant 0 : index
      %c0_11 = arith.constant 0 : index
      %12 = vector.load %arg7[%c0_10, %c0_11] : memref<8x128xf32, #tpu.memory_space<vmem>>, vector<8x128xf32>
      %c0_12 = arith.constant 0 : index
      %c0_13 = arith.constant 0 : index
      %13 = vector.load %arg6[%c0_12, %c0_13] : memref<8x128xf32, #tpu.memory_space<vmem>>, vector<8x128xf32>
      tpu.vector_store %arg6[%c0_12, %c0_13], %12 {strides = array<i32>} : memref<8x128xf32, #tpu.memory_space<vmem>>, vector<8x128xf32>,
    } else {
    }
    return
  }
  func.func @transform_0(%arg0: i32, %arg1: i32, %arg2: i32) -> (i32, i32) {
    %c0_i32 = arith.constant 0 : i32
    return %arg0, %arg2 : i32, i32
  }
  func.func @transform_1(%arg0: i32, %arg1: i32, %arg2: i32) -> (i32, i32) {
    %c0_i32 = arith.constant 0 : i32
    return %arg2, %arg1 : i32, i32
  }
  func.func @transform_2(%arg0: i32, %arg1: i32, %arg2: i32) -> (i32, i32) {
    %c0_i32 = arith.constant 0 : i32
    %c0_i32_0 = arith.constant 0 : i32
    return %c0_i32, %arg1 : i32, i32
  }
  func.func @transform_3(%arg0: i32, %arg1: i32, %arg2: i32) -> (i32, i32) {
    %c0_i32 = arith.constant 0 : i32
    return %arg0, %arg1 : i32, i32
  }
}

</mosaic_0001>

<llo_original>
// kernel: _lazy_linear_2d.1
$region0: #{_lazy_linear_2d.1}
  #allocation0 [shape = 'u32[]', space=smem, size = 0x4, offset = 0x4, fixed_abs, tag = 'smem constant byte address 0x4 - core index']
  #allocation1 [shape = 'u32[144,128]{1,0:T(1,128)}', space=vmem, size = 0x12000, scoped, tag = 'internal scratch']
  #allocation2 [shape = 'f32[8,128]{1,0:T(8,128)}', space=vmem, size = 0x1000, scoped, tag = 'scratch operand']
  %s0 = inlined_call_operand.vmem [shape: f32[8,128], index: 0, kind: input, shape index: {}]
  %s1 = inlined_call_operand.vmem [shape: f32[128,128], index: 1, kind: input, shape index: {}]
  %s2 = inlined_call_operand.vmem [shape: f32[1,128], index: 2, kind: input, shape index: {}]
  %s3 = inlined_call_operand.hbm [shape: f32[8,128], index: 3, kind: output, shape index: {}]
  %s4 = sld [smem:[#allocation0]]
  $region30: #{_lazy_linear_2d.1} parent=0
    _
  %s6 = ssub.s32 1, %s4
  %s7 = scalar_select 0, %s6, %s4
  $region1: #{_lazy_linear_2d.1} parent=0
    #allocation3 [shape = 'u8[4096]{0}', space=vmem, size = 0x1000, scoped, tag = 'output window, operand 0, single buffered']
    #allocation4 [shape = 's32[1]{0}', space=sflag, size = 0x4, scoped, tag = 'scoped memory for _lazy_linear_2d.1']
    %8 = vsyncpa [#allocation4], 0
    // Predicated region
    $region2: #{_lazy_linear_2d.1} parent=1 // pred_check
      _
    $region3: #{_lazy_linear_2d.1} parent=1 // pred_check_branch
      %10 = sbr.rel (0) target = $region5
    $region4: #{_lazy_linear_2d.1} parent=1 // pred_region
      _
    $region5: #{_lazy_linear_2d.1} parent=1 // pred_fallthru
      _
    // Predicated region
    $region6: #{_lazy_linear_2d.1} parent=1 // pred_check
      _
    $region7: #{_lazy_linear_2d.1} parent=1 // pred_check_branch
      %12 = sbr.rel (0) target = $region9
    $region8: #{_lazy_linear_2d.1} parent=1 // pred_region
      _
    $region9: #{_lazy_linear_2d.1} parent=1 // pred_fallthru
      _
    // Predicated region
    $region10: #{_lazy_linear_2d.1} parent=1 // pred_check
      _
    $region11: #{_lazy_linear_2d.1} parent=1 // pred_check_branch
      %14 = sbr.rel (0) target = $region13
    $region12: #{_lazy_linear_2d.1} parent=1 // pred_region
      _
    $region13: #{_lazy_linear_2d.1} parent=1 // pred_fallthru
      _
    %p15 = scmp.eq.s32.totalorder 0, 0
    // Predicated region
    $region14: #{_lazy_linear_2d.1} parent=1 // pred_check
      %p16 = pneg %p15
    $region15: #{_lazy_linear_2d.1} parent=1 // pred_check_branch
      %18 = sbr.rel (%p16) target = $region17
    $region16: #{_lazy_linear_2d.1} parent=1 // pred_region
      %v19 = vld [vmem:[%s2] sm:$0x1]
      %v21 = vlaneseq
      %v22 = vshrl.u32 %v21, 7
      %v23 = vsub.s32 0, %v22
      %v24 = vrot.slane %v19, %v23
      %26 = vst [vmem:[#allocation2] sm:$0xff] %v24
    $region17: #{_lazy_linear_2d.1} parent=1 // pred_fallthru
      _
    %v27 = vld [vmem:[#allocation2] sm:$0xff]
    %v28 = vld [vmem:[%s0] sm:$0xff]
    %v29 = vld [vmem:[%s1] sm:$0xff]
    %v30 = vld [vmem:[%s1 + $0x8] sm:$0xff]
    %v31 = vld [vmem:[%s1 + $0x10] sm:$0xff]
    %v32 = vld [vmem:[%s1 + $0x18] sm:$0xff]
    %v33 = vld [vmem:[%s1 + $0x20] sm:$0xff]
    %v34 = vld [vmem:[%s1 + $0x28] sm:$0xff]
    %v35 = vld [vmem:[%s1 + $0x30] sm:$0xff]
    %v36 = vld [vmem:[%s1 + $0x38] sm:$0xff]
    %v37 = vld [vmem:[%s1 + $0x40] sm:$0xff]
    %v38 = vld [vmem:[%s1 + $0x48] sm:$0xff]
    %v39 = vld [vmem:[%s1 + $0x50] sm:$0xff]
    %v40 = vld [vmem:[%s1 + $0x58] sm:$0xff]
    %v41 = vld [vmem:[%s1 + $0x60] sm:$0xff]
    %v42 = vld [vmem:[%s1 + $0x68] sm:$0xff]
    %v43 = vld [vmem:[%s1 + $0x70] sm:$0xff]
    %v44 = vld [vmem:[%s1 + $0x78] sm:$0xff]
    %45 = vmatprep.subr.mxu0 0.0
    %46 = vmatpush1.msra.mxu0 %v44
    %47 = vmatprep.subr.mxu0 0.0
    %48 = vmatpush1.msra.mxu0 %v43
    %49 = vmatprep.subr.mxu0 0.0
    %50 = vmatpush1.msra.mxu0 %v42
    %51 = vmatprep.subr.mxu0 0.0
    %52 = vmatpush1.msra.mxu0 %v41
    %53 = vmatprep.subr.mxu0 0.0
    %54 = vmatpush1.msra.mxu0 %v40
    %55 = vmatprep.subr.mxu0 0.0
    %56 = vmatpush1.msra.mxu0 %v39
    %57 = vmatprep.subr.mxu0 0.0
    %58 = vmatpush1.msra.mxu0 %v38
    %59 = vmatprep.subr.mxu0 0.0
    %60 = vmatpush1.msra.mxu0 %v37
    %61 = vmatprep.subr.mxu0 0.0
    %62 = vmatpush1.msra.mxu0 %v36
    %63 = vmatprep.subr.mxu0 0.0
    %64 = vmatpush1.msra.mxu0 %v35
    %65 = vmatprep.subr.mxu0 0.0
    %66 = vmatpush1.msra.mxu0 %v34
    %67 = vmatprep.subr.mxu0 0.0
    %68 = vmatpush1.msra.mxu0 %v33
    %69 = vmatprep.subr.mxu0 0.0
    %70 = vmatpush1.msra.mxu0 %v32
    %71 = vmatprep.subr.mxu0 0.0
    %72 = vmatpush1.msra.mxu0 %v31
    %73 = vmatprep.subr.mxu0 0.0
    %74 = vmatpush1.msra.mxu0 %v30
    %75 = vmatprep.subr.mxu0 0.0
    %76 = vmatpush1.msra.mxu0 %v29
    %77 = vmatprep.subr.mxu0 0.0
    %78 = vmatpush2.msra.mxu0 0.0
    %79 = vmatprep.subr.mxu0 0.0
    %80 = vmatpush2.msra.mxu0 0.0
    %81 = vmatprep.subr.mxu0 0.0
    %82 = vmatpush2.msra.mxu0 0.0
    %83 = vmatprep.subr.mxu0 0.0
    %84 = vmatpush2.msra.mxu0 0.0
    %85 = vmatprep.subr.mxu0 0.0
    %86 = vmatpush2.msra.mxu0 0.0
    %87 = vmatprep.subr.mxu0 0.0
    %88 = vmatpush2.msra.mxu0 0.0
    %89 = vmatprep.subr.mxu0 0.0
    %90 = vmatpush2.msra.mxu0 0.0
    %91 = vmatprep.subr.mxu0 0.0
    %92 = vmatpush2.msra.mxu0 0.0
    %93 = vmatprep.subr.mxu0 0.0
    %94 = vmatpush2.msra.mxu0 0.0
    %95 = vmatprep.subr.mxu0 0.0
    %96 = vmatpush2.msra.mxu0 0.0
    %97 = vmatprep.subr.mxu0 0.0
    %98 = vmatpush2.msra.mxu0 0.0
    %99 = vmatprep.subr.mxu0 0.0
    %100 = vmatpush2.msra.mxu0 0.0
    %101 = vmatprep.subr.mxu0 0.0
    %102 = vmatpush2.msra.mxu0 0.0
    %103 = vmatprep.subr.mxu0 0.0
    %104 = vmatpush2.msra.mxu0 0.0
    %105 = vmatprep.subr.mxu0 0.0
    %106 = vmatpush2.msra.mxu0 0.0
    %107 = vmatprep.subr.mxu0 0.0
    %108 = vmatpush2.msra.mxu0 0.0
    %109 = vmatprep.mubr.f32.mxu0 0.0
    %110 = vmatmul.mubr.f32.gmra.mxu0 %v28
    %v111 = vpop.f32.mrf.mxu0
    %v112 = vadd.f32 0.0, %v111
    %v113 = vpop.f32.mrf.mxu0
    %114 = vdwg.mxu0
    %v115 = vadd.f32 %v27, %v112
    %116 = vst [vmem:[#allocation2] sm:$0xff] %v115
    // Predicated region
    $region18: #{_lazy_linear_2d.1} parent=1 // pred_check
      %p117 = pneg %p15
    $region19: #{_lazy_linear_2d.1} parent=1 // pred_check_branch
      %119 = sbr.rel (%p117) target = $region21
    $region20: #{_lazy_linear_2d.1} parent=1 // pred_region
      %v120 = vld [vmem:[#allocation2] sm:$0xff]
      %121 = vst [vmem:[#allocation3] sm:$0xff] %v120
    $region21: #{_lazy_linear_2d.1} parent=1 // pred_fallthru
      _
    // Predicated region
    $region22: #{_lazy_linear_2d.1} parent=1 // pred_check
      _
    $region23: #{_lazy_linear_2d.1} parent=1 // pred_check_branch
      %123 = sbr.rel (0) target = $region25
    $region24: #{_lazy_linear_2d.1} parent=1 // pred_region
      %s125 = ssub.s32 128, 128
      %126 = vsyncadd [#allocation4], %s125
      %s128 = sshll.u32 [#allocation3], 4
      %s129 = int_to_ptr.vmem [resolvable:$true] %s128
      %131 = dma.vmem_to_hbm [thread:$0]  %s129, 128, %s3, [#allocation4]
    $region25: #{_lazy_linear_2d.1} parent=1 // pred_fallthru
      _
    // Predicated region
    $region26: #{_lazy_linear_2d.1} parent=1 // pred_check
      _
    $region27: #{_lazy_linear_2d.1} parent=1 // pred_check_branch
      %133 = sbr.rel (0) target = $region29
    $region28: #{_lazy_linear_2d.1} parent=1 // pred_region
      %134 = dma.done [#allocation4], 128
    $region29: #{_lazy_linear_2d.1} parent=1 // pred_fallthru
      _
    %135 = vsyncpa [#allocation4], 1

</llo_original>
